<compile_context>
chip_gen: v7x
topology: tpu7x:2x2x1
jax: 0.10.0
libtpu: 0.0.40
codegen_flags: <defaults>
</compile_context>

<pallas_src>
import math

import jax
import jax.numpy as jnp
from jax import lax
from jax.experimental import pallas as pl
from jax.experimental.pallas import tpu as pltpu

HIDDEN = 512
INPUT_SIZE = 7
NUM_LAYERS = 3
VMEM_LIMIT = 32 * 1024 * 1024


# ----------------------------------------------------------------------------
# Kernel 1: hoisted input projection ("pre-gates") for one bidirectional layer.
# grid=(2,) over directions; each step does one (T*B, D_in) x (D_in, 4H) matmul.
# ----------------------------------------------------------------------------
def _pregate_kernel(x_ref, wih_ref, b_ref, g_ref):
    # x: (T*B, D_in) f32 ; wih: (D_in, 4H) bf16 ; b: (1, 4H) f32 -> g: (T*B, 4H) f32
    g_ref[...] = (
        jnp.dot(x_ref[...].astype(jnp.bfloat16), wih_ref[...],
                preferred_element_type=jnp.float32)
        + b_ref[...]
    )


# ----------------------------------------------------------------------------
# Kernel 2: the serial recurrence for one direction (grid=(2,): fwd / bwd).
# Whole T-step loop lives inside a single kernel invocation; only the small
# h @ Whh^T matmul + activations are on the serial critical path.
# ----------------------------------------------------------------------------
def _bilstm_recur_kernel(g_ref, whh_ref, out_ref):
    # g_ref:   (T, B, 4H) f32  pre-gates (x@Wih^T + b_ih + b_hh) for this direction
    # whh_ref: (H, 4H)    bf16 recurrent weights for this direction
    # out_ref: (T, B, H)  f32  this direction's half of the (T, B, 2H) output
    d = pl.program_id(0)                 # 0 = forward in time, 1 = backward
    T, B, _ = g_ref.shape
    H = HIDDEN
    whh = whh_ref[...]                   # stays resident in VMEM across the loop

    def step(s, carry):
        h_prev, c_prev = carry
        t = jnp.where(d == 0, s, T - 1 - s)          # original time index
        gates = g_ref[t] + jnp.dot(h_prev.astype(jnp.bfloat16), whh,
                                   preferred_element_type=jnp.float32)
        i = jax.nn.sigmoid(gates[:, 0:H])            # PyTorch gate order i,f,g,o
        f = jax.nn.sigmoid(gates[:, H:2 * H])
        g = jnp.tanh(gates[:, 2 * H:3 * H])
        o = jax.nn.sigmoid(gates[:, 3 * H:4 * H])
        c_new = f * c_prev + i * g
        h_new = o * jnp.tanh(c_new)
        out_ref[t] = h_new
        return h_new, c_new

    h0 = jnp.zeros((B, H), jnp.float32)
    c0 = jnp.zeros((B, H), jnp.float32)
    lax.fori_loop(0, T, step, (h0, c0), unroll=True)


def bilstm_layer(x_tbd, lp):
    """One bidirectional LSTM layer: (T, B, D_in) f32 -> (T, B, 2H) f32."""
    T, B, D = x_tbd.shape
    H = HIDDEN
    TB = T * B

    # 1) Batched input projection for both directions (no serial dependence).
    x2d = x_tbd.reshape(TB, D)
    pregates = pl.pallas_call(
        _pregate_kernel,
        out_shape=jax.ShapeDtypeStruct((2, TB, 4 * H), jnp.float32),
        grid=(2,),
        in_specs=[
            pl.BlockSpec((TB, D), lambda d: (0, 0)),            # x (shared)
            pl.BlockSpec((None, D, 4 * H), lambda d: (d, 0, 0)),  # Wih^T per dir
            pl.BlockSpec((None, 1, 4 * H), lambda d: (d, 0, 0)),  # bias per dir
        ],
        out_specs=pl.BlockSpec((None, TB, 4 * H), lambda d: (d, 0, 0)),
        compiler_params=pltpu.CompilerParams(
            dimension_semantics=("parallel",),
            vmem_limit_bytes=VMEM_LIMIT),
    )(x2d, lp["wih_t"], lp["b"])
    pregates = pregates.reshape(2, T, B, 4 * H)       # free row-major reshape

    # 2) Serial recurrence; both directions in one call, direction axis parallel
    #    (each v7x TensorCore takes one direction; single loop on v5e/v6e).
    out = pl.pallas_call(
        _bilstm_recur_kernel,
        out_shape=jax.ShapeDtypeStruct((T, B, 2 * H), jnp.float32),
        grid=(2,),
        in_specs=[
            pl.BlockSpec((None, T, B, 4 * H), lambda d: (d, 0, 0, 0)),  # pre-gates
            pl.BlockSpec((None, H, 4 * H), lambda d: (d, 0, 0)),        # Whh^T
        ],
        out_specs=pl.BlockSpec((T, B, H), lambda d: (0, 0, d)),  # fwd->0:H, bwd->H:2H
        compiler_params=pltpu.CompilerParams(
            dimension_semantics=("parallel",),
            vmem_limit_bytes=VMEM_LIMIT),
    )(pregates, lp["whh_t"])
    return out


# ----------------------------------------------------------------------------
# Kernel 3: MLP head.  BatchNorm1d (eval) already folded into the following
# Linear weights, so this is 5 matmuls + ReLU + sigmoid, single invocation.
# ----------------------------------------------------------------------------
def _mlp_kernel(x_ref, w1, b1, w2, b2, w3, b3, w4, b4, w5, b5, out_ref):
    def lin(h, w, b):
        return jnp.dot(h.astype(jnp.bfloat16), w[...],
                       preferred_element_type=jnp.float32) + b[...]

    h = x_ref[...]
    h = jnp.maximum(lin(h, w1, b1), 0.0)   # fc1 + ReLU   (bn1 folded into fc2)
    h = jnp.maximum(lin(h, w2, b2), 0.0)   # fc2 + ReLU   (bn2 folded into fc3)
    h = jnp.maximum(lin(h, w3, b3), 0.0)   # fc3 + ReLU   (bn3 folded into fc4)
    h = jnp.maximum(lin(h, w4, b4), 0.0)   # fc4 + ReLU   (bn4 folded into fc5)
    out_ref[...] = jax.nn.sigmoid(lin(h, w5, b5))


def mlp_forward(feat, mp):
    B = feat.shape[0]
    args = [feat]
    for w, b in zip(mp["w"], mp["b"]):
        args += [w, b]
    vmem_spec = pl.BlockSpec(memory_space=pltpu.MemorySpace.VMEM)
    return pl.pallas_call(
        _mlp_kernel,
        out_shape=jax.ShapeDtypeStruct((B, 1), jnp.float32),
        in_specs=[vmem_spec] * len(args),
        out_specs=vmem_spec,
        compiler_params=pltpu.CompilerParams(vmem_limit_bytes=VMEM_LIMIT),
    )(*args)


# ----------------------------------------------------------------------------
# Full model forward (glue in plain JAX: transpose, reshape, param plumbing).
# ----------------------------------------------------------------------------
def model_forward(x, params):
    # x: (B, T, 7), batch_first like the PyTorch module.
    inp = jnp.transpose(x, (1, 0, 2))                     # (T, B, 7) time-major
    for layer in range(NUM_LAYERS):
        inp = bilstm_layer(inp, params["lstm"][layer])    # (T, B, 2H)
    feat = inp[-1]                                        # output[:, -1, :] -> (B, 1024)
    # Dropout layers are identity in eval mode.
    out = mlp_forward(feat, params["mlp"])                # (B, 1)
    return out[:, 0]                                      # squeeze(1)


# ----------------------------------------------------------------------------
# Deterministic parameter init (shapes match nn.LSTM / nn.Linear / BatchNorm1d).
# Matmul weights stored bf16 (transposed to (in, out)); biases / BN stats f32.
# ----------------------------------------------------------------------------
def _uniform(key, shape, bound):
    return jax.random.uniform(key, shape, jnp.float32, -bound, bound)


def init_params(key):
    H = HIDDEN
    k_lstm = 1.0 / math.sqrt(H)
    keys = iter(jax.random.split(key, 64))
    params = {"lstm": []}

    for layer in range(NUM_LAYERS):
        d_in = INPUT_SIZE if layer == 0 else 2 * H
        wih_l, whh_l, b_l = [], [], []
        for _ in range(2):                     # fwd, bwd
            wih = _uniform(next(keys), (4 * H, d_in), k_lstm)
            whh = _uniform(next(keys), (4 * H, H), k_lstm)
            b_ih = _uniform(next(keys), (4 * H,), k_lstm)
            b_hh = _uniform(next(keys), (4 * H,), k_lstm)
            wih_l.append(wih.T.astype(jnp.bfloat16))        # (d_in, 4H)
            whh_l.append(whh.T.astype(jnp.bfloat16))        # (H, 4H)
            b_l.append((b_ih + b_hh)[None, :])              # (1, 4H) f32
        params["lstm"].append({"wih_t": jnp.stack(wih_l),   # (2, d_in, 4H)
                               "whh_t": jnp.stack(whh_l),   # (2, H, 4H)
                               "b": jnp.stack(b_l)})        # (2, 1, 4H)

    # MLP + BatchNorm1d (eval: running stats, PyTorch defaults gamma=1, beta=0,
    # mean=0, var=1).  BN_k is folded into Linear_{k+1}.
    dims = [(1024, 512), (512, 128), (128, 64), (64, 16), (16, 1)]
    eps = 1e-5
    raw_w, raw_b, raw_s, raw_t = [], [], [], []
    for fan_in, fan_out in dims:
        kb = 1.0 / math.sqrt(fan_in)
        raw_w.append(_uniform(next(keys), (fan_out, fan_in), kb).T)   # (in, out) f32
        raw_b.append(_uniform(next(keys), (fan_out,), kb)[None, :])   # (1, out)
    for _, fan_out in dims[:4]:
        gamma = jnp.ones((fan_out,), jnp.float32)
        beta = jnp.zeros((fan_out,), jnp.float32)
        mean = jnp.zeros((fan_out,), jnp.float32)
        var = jnp.ones((fan_out,), jnp.float32)
        s = gamma / jnp.sqrt(var + eps)
        raw_s.append(s[None, :])
        raw_t.append((beta - mean * s)[None, :])

    fused_w, fused_b = [], []
    for i in range(5):
        if i == 0:
            w_f, b_f = raw_w[i], raw_b[i]
        else:
            w_f = raw_s[i - 1].T * raw_w[i]              # scale input rows by BN scale
            b_f = raw_t[i - 1] @ raw_w[i] + raw_b[i]     # push BN shift through W
        fused_w.append(w_f.astype(jnp.bfloat16))
        fused_b.append(b_f)
    params["mlp"] = {"w": fused_w, "b": fused_b}                        # kernel form
    params["mlp_raw"] = {"w": [w.astype(jnp.bfloat16) for w in raw_w],  # reference form
                         "b": raw_b, "s": raw_s, "t": raw_t}
    return params


# ----------------------------------------------------------------------------
# Pure-JAX reference (same bf16 matmul operands / f32 accumulation, but using
# the un-fused BN form and per-direction scan) for a numerical sanity check.
# ----------------------------------------------------------------------------
def _lstm_dir_ref(x_tbd, wih_t, whh_t, bias, reverse):
    T, B, _ = x_tbd.shape
    H = HIDDEN
    xs = x_tbd[::-1] if reverse else x_tbd

    def step(carry, x_t):
        h, c = carry
        gates = (jnp.dot(x_t.astype(jnp.bfloat16), wih_t,
                         preferred_element_type=jnp.float32)
                 + jnp.dot(h.astype(jnp.bfloat16), whh_t,
                           preferred_element_type=jnp.float32)
                 + bias)
        i = jax.nn.sigmoid(gates[:, :H])
        f = jax.nn.sigmoid(gates[:, H:2 * H])
        g = jnp.tanh(gates[:, 2 * H:3 * H])
        o = jax.nn.sigmoid(gates[:, 3 * H:4 * H])
        c = f * c + i * g
        h = o * jnp.tanh(c)
        return (h, c), h

    init = (jnp.zeros((B, H), jnp.float32), jnp.zeros((B, H), jnp.float32))
    _, ys = lax.scan(step, init, xs)
    return ys[::-1] if reverse else ys


def model_forward_ref(x, params):
    inp = jnp.transpose(x, (1, 0, 2))
    for layer in range(NUM_LAYERS):
        lp = params["lstm"][layer]
        out_f = _lstm_dir_ref(inp, lp["wih_t"][0], lp["whh_t"][0], lp["b"][0], False)
        out_b = _lstm_dir_ref(inp, lp["wih_t"][1], lp["whh_t"][1], lp["b"][1], True)
        inp = jnp.concatenate([out_f, out_b], axis=-1)
    h = inp[-1]
    raw = params["mlp_raw"]
    for i in range(4):
        h = jnp.maximum(jnp.dot(h.astype(jnp.bfloat16), raw["w"][i],
                                preferred_element_type=jnp.float32) + raw["b"][i], 0.0)
        h = h * raw["s"][i] + raw["t"][i]
    logits = jnp.dot(h.astype(jnp.bfloat16), raw["w"][4],
                     preferred_element_type=jnp.float32) + raw["b"][4]
    return jax.nn.sigmoid(logits)[:, 0]


if __name__ == "__main__":
    key = jax.random.PRNGKey(0)
    k_params, k_x = jax.random.split(key)

    B, T = 2, 8
    x = jax.random.normal(k_x, (B, T, INPUT_SIZE), jnp.float32)
    params = init_params(k_params)

    out = jax.block_until_ready(model_forward(x, params))
    ref = jax.block_until_ready(model_forward_ref(x, params))

    assert out.shape == (B,), out.shape
    assert bool(jnp.all(jnp.isfinite(out)))
    assert bool(jnp.allclose(out, ref, atol=1e-2, rtol=1e-2)), (out, ref)
    print("KERNEL_OK")
</pallas_src>

<mosaic_0001>
module attributes {stable_mosaic.version = 11 : i64} {
  func.func @_pregate_kernel(%arg0: i32, %arg1: memref<16x7xf32, #tpu.memory_space<vmem>>, %arg2: memref<1x7x2048xbf16, #tpu.memory_space<vmem>>, %arg3: memref<1x1x2048xf32, #tpu.memory_space<vmem>>, %arg4: memref<1x16x2048xf32, #tpu.memory_space<vmem>>) attributes {dimension_semantics = [#tpu.dimension_semantics<parallel>], iteration_bounds = array<i64: 2>, scalar_prefetch = 0 : i64, scratch_operands = 0 : i64, tpu.core_type = #tpu.core_type<tc>, window_params = [{pipeline_mode = #tpu.pipeline_mode<synchronous>, transform_indices = @transform_0, window_bounds = array<i64: 16, 7>}, {transform_indices = @transform_1, window_bounds = array<i64: 1, 7, 2048>}, {transform_indices = @transform_2, window_bounds = array<i64: 1, 1, 2048>}, {transform_indices = @transform_3, window_bounds = array<i64: 1, 16, 2048>}]} {
    %c0 = arith.constant 0 : index
    %c0_0 = arith.constant 0 : index
    %0 = vector.load %arg1[%c0, %c0_0] : memref<16x7xf32, #tpu.memory_space<vmem>>, vector<16x7xf32>
    %1 = arith.truncf %0 : vector<16x7xf32> to vector<16x7xbf16>
    %c0_1 = arith.constant 0 : index
    %c0_2 = arith.constant 0 : index
    %c0_3 = arith.constant 0 : index
    %2 = vector.load %arg2[%c0_1, %c0_2, %c0_3] : memref<1x7x2048xbf16, #tpu.memory_space<vmem>>, vector<1x7x2048xbf16>
    %3 = vector.shape_cast %2 : vector<1x7x2048xbf16> to vector<7x2048xbf16>
    %cst = arith.constant dense<0.000000e+00> : vector<16x2048xf32>
    %4 = tpu.matmul %1, %3, %cst {dimension_numbers = #tpu.dot_dimension_numbers<[1], [0], [0], [1], [0, 0, 1, 1], [], []>} : vector<16x7xbf16>, vector<7x2048xbf16>, vector<16x2048xf32> -> vector<16x2048xf32>
    %c0_4 = arith.constant 0 : index
    %c0_5 = arith.constant 0 : index
    %c0_6 = arith.constant 0 : index
    %5 = vector.load %arg3[%c0_4, %c0_5, %c0_6] : memref<1x1x2048xf32, #tpu.memory_space<vmem>>, vector<1x1x2048xf32>
    %6 = vector.shape_cast %5 : vector<1x1x2048xf32> to vector<1x2048xf32>
    %7 = vector.broadcast %6 : vector<1x2048xf32> to vector<16x2048xf32>
    %8 = arith.addf %4, %7 : vector<16x2048xf32>
    %c0_7 = arith.constant 0 : index
    %c0_8 = arith.constant 0 : index
    %c0_9 = arith.constant 0 : index
    %9 = vector.load %arg4[%c0_7, %c0_8, %c0_9] : memref<1x16x2048xf32, #tpu.memory_space<vmem>>, vector<1x16x2048xf32>
    %10 = vector.shape_cast %9 : vector<1x16x2048xf32> to vector<16x2048xf32>
    %11 = vector.shape_cast %8 : vector<16x2048xf32> to vector<1x16x2048xf32>
    tpu.vector_store %arg4[%c0_7, %c0_8, %c0_9], %11 {strides = array<i32>} : memref<1x16x2048xf32, #tpu.memory_space<vmem>>, vector<1x16x2048xf32>,
    return
  }
  func.func @transform_0(%arg0: i32) -> (i32, i32) {
    %c0_i32 = arith.constant 0 : i32
    %c0_i32_0 = arith.constant 0 : i32
    %c0_i32_1 = arith.constant 0 : i32
    return %c0_i32, %c0_i32_0 : i32, i32
  }
  func.func @transform_1(%arg0: i32) -> (i32, i32, i32) {
    %c0_i32 = arith.constant 0 : i32
    %c0_i32_0 = arith.constant 0 : i32
    %c0_i32_1 = arith.constant 0 : i32
    return %arg0, %c0_i32, %c0_i32_0 : i32, i32, i32
  }
  func.func @transform_2(%arg0: i32) -> (i32, i32, i32) {
    %c0_i32 = arith.constant 0 : i32
    %c0_i32_0 = arith.constant 0 : i32
    %c0_i32_1 = arith.constant 0 : i32
    return %arg0, %c0_i32, %c0_i32_0 : i32, i32, i32
  }
  func.func @transform_3(%arg0: i32) -> (i32, i32, i32) {
    %c0_i32 = arith.constant 0 : i32
    %c0_i32_0 = arith.constant 0 : i32
    %c0_i32_1 = arith.constant 0 : i32
    return %arg0, %c0_i32, %c0_i32_0 : i32, i32, i32
  }
}

</mosaic_0001>

<llo_original>
// kernel: tpu_custom_call.1
$region0: #{tpu_custom_call.1}
  #allocation0 [shape = 'u32[]', space=smem, size = 0x4, offset = 0x4, fixed_abs, tag = 'smem constant byte address 0x4 - core index']
  #allocation1 [shape = 'u32[144,128]{1,0:T(1,128)}', space=vmem, size = 0x12000, scoped, tag = 'internal scratch']
  %s0 = inlined_call_operand.vmem [shape: f32[16,7], index: 0, kind: input, shape index: {}]
  %s1 = inlined_call_operand.vmem [shape: bf16[2,7,2048], index: 1, kind: input, shape index: {}]
  %s2 = inlined_call_operand.vmem [shape: f32[2,1,2048], index: 2, kind: input, shape index: {}]
  %s3 = inlined_call_operand.hbm [shape: f32[2,16,2048], index: 3, kind: output, shape index: {}]
  %s4 = sld [smem:[#allocation0]]
  $region45: #{tpu_custom_call.1} parent=0
    _
  %s6 = ssub.s32 1, %s4
  %s7 = scalar_select 0, %s6, %s4
  $region1: #{tpu_custom_call.1} parent=0
    #allocation2 [shape = 'u8[262144]{0}', space=vmem, size = 0x40000, scoped, tag = 'output window, operand 0']
    #allocation3 [shape = 's32[2]{0}', space=sflag, size = 0x8, scoped, tag = 'scoped memory for tpu_custom_call.1']
    %8 = vsyncpa [#allocation3], 0
    %s9 = scalar_lea.sflag [#allocation3], 1
    %10 = vsyncpa %s9, 0
    loop: start=0, step=1, limit=4
    $region2: #{tpu_custom_call.1} parent=1 // loop_pre_header
      _
    $region3: #{tpu_custom_call.1} parent=1 // loop_header
      %s12 = sphi 0, %s16
      %p13 = scmp.ge.s32.totalorder %s12, 4
      %s20 = sphi 0, %s20
      %s22 = sphi 0, %s20
      %s23 = sphi 0, %s22
      %s37 = sphi 0, %s23
      %s43 = sphi 0, %s45
      %s46 = sphi 0, %s43
      %s47 = sphi 0, %s46
      %s63 = sphi 0, %s47
      %s69 = sphi 0, %s71
      %s72 = sphi 0, %s69
      %s73 = sphi 0, %s72
      %s89 = sphi 0, %s73
      %s95 = sphi 0, %s97
      %s98 = sphi 0, %s95
      %s99 = sphi 0, %s98
      %s115 = sphi 0, %s99
    $region4: #{tpu_custom_call.1} parent=1 // loop_header_branch
      %15 = sbr.rel (%p13) target = $region8
    $region5: #{tpu_custom_call.1} parent=1 // loop_body
      %s17 = ssub.s32 %s12, 1
      %s18 = ssub.s32 %s12, 2
      %s19 = sadd.s32 %s12, 1
      %s21 = sadd.s32 %s20, 1
      %p24 = scmp.eq.s32.totalorder %s12, 1
      %p25 = scmp.ne.s32.totalorder %s20, %s22
      %p26 = scmp.eq.s32.totalorder %s12, 0
      %p27 = por %p25, %p26
      %p28 = scmp.ne.s32.totalorder %s20, %s22
      %p29 = scmp.eq.s32.totalorder %s17, 1
      %p30 = por %p28, %p29
      %p31 = scmp.ne.s32.totalorder %s22, %s23
      %p32 = scmp.eq.s32.totalorder %s17, 0
      %p33 = por %p31, %p32
      %p34 = scmp.ne.s32.totalorder %s22, %s23
      %p35 = scmp.eq.s32.totalorder %s18, 1
      %p36 = por %p34, %p35
      %p38 = scmp.ne.s32.totalorder %s23, %s37
      %p39 = scmp.eq.s32.totalorder %s18, 0
      %p40 = por %p38, %p39
      %s41 = ssub.s32 %s12, %s19
      %p42 = scmp.eq.s32.totalorder %s41, 0
      %s44 = sadd.s32 %s43, 1
      %s45 = scalar_select %p42, %s43, %s44
      %p48 = pneg %p42
      %p49 = scmp.eq.s32.totalorder %s12, 1
      %p50 = por %p48, %p49
      %p51 = scmp.ne.s32.totalorder %s43, %s46
      %p52 = scmp.eq.s32.totalorder %s12, 0
      %p53 = por %p51, %p52
      %p54 = scmp.ne.s32.totalorder %s43, %s46
      %p55 = scmp.eq.s32.totalorder %s17, 1
      %p56 = por %p54, %p55
      %p57 = scmp.ne.s32.totalorder %s46, %s47
      %p58 = scmp.eq.s32.totalorder %s17, 0
      %p59 = por %p57, %p58
      %p60 = scmp.ne.s32.totalorder %s46, %s47
      %p61 = scmp.eq.s32.totalorder %s18, 1
      %p62 = por %p60, %p61
      %p64 = scmp.ne.s32.totalorder %s47, %s63
      %p65 = scmp.eq.s32.totalorder %s18, 0
      %p66 = por %p64, %p65
      %s67 = ssub.s32 %s12, %s19
      %p68 = scmp.eq.s32.totalorder %s67, 0
      %s70 = sadd.s32 %s69, 1
      %s71 = scalar_select %p68, %s69, %s70
      %p74 = pneg %p68
      %p75 = scmp.eq.s32.totalorder %s12, 1
      %p76 = por %p74, %p75
      %p77 = scmp.ne.s32.totalorder %s69, %s72
      %p78 = scmp.eq.s32.totalorder %s12, 0
      %p79 = por %p77, %p78
      %p80 = scmp.ne.s32.totalorder %s69, %s72
      %p81 = scmp.eq.s32.totalorder %s17, 1
      %p82 = por %p80, %p81
      %p83 = scmp.ne.s32.totalorder %s72, %s73
      %p84 = scmp.eq.s32.totalorder %s17, 0
      %p85 = por %p83, %p84
      %p86 = scmp.ne.s32.totalorder %s72, %s73
      %p87 = scmp.eq.s32.totalorder %s18, 1
      %p88 = por %p86, %p87
      %p90 = scmp.ne.s32.totalorder %s73, %s89
      %p91 = scmp.eq.s32.totalorder %s18, 0
      %p92 = por %p90, %p91
      %s93 = ssub.s32 %s12, %s19
      %p94 = scmp.eq.s32.totalorder %s93, 0
      %s96 = sadd.s32 %s95, 1
      %s97 = scalar_select %p94, %s95, %s96
      %p100 = pneg %p94
      %p101 = scmp.eq.s32.totalorder %s12, 1
      %p102 = por %p100, %p101
      %p103 = scmp.ne.s32.totalorder %s95, %s98
      %p104 = scmp.eq.s32.totalorder %s12, 0
      %p105 = por %p103, %p104
      %p106 = scmp.ne.s32.totalorder %s95, %s98
      %p107 = scmp.eq.s32.totalorder %s17, 1
      %p108 = por %p106, %p107
      %p109 = scmp.ne.s32.totalorder %s98, %s99
      %p110 = scmp.eq.s32.totalorder %s17, 0
      %p111 = por %p109, %p110
      %p112 = scmp.ne.s32.totalorder %s98, %s99
      %p113 = scmp.eq.s32.totalorder %s18, 1
      %p114 = por %p112, %p113
      %p116 = scmp.ne.s32.totalorder %s99, %s115
      %p117 = scmp.eq.s32.totalorder %s18, 0
      %p118 = por %p116, %p117
      %p119 = scmp.le.s32.totalorder 1, %s12
      %p120 = scmp.lt.s32.totalorder %s12, 3
      %p121 = pnand %p119, %p120
      %p122 = pneg %p121
      // Predicated region
      $region9: #{tpu_custom_call.1} parent=5 // pred_check
        _
      $region10: #{tpu_custom_call.1} parent=5 // pred_check_branch
        %124 = sbr.rel (%p121) target = $region12
      $region11: #{tpu_custom_call.1} parent=5 // pred_region
        %s125 = ssub.s32 %s12, 1
        // Predicated region
        $region13: #{tpu_custom_call.1} parent=11 // pred_check
          %p126 = pneg %p33
        $region14: #{tpu_custom_call.1} parent=11 // pred_check_branch
          %128 = sbr.rel (%p126) target = $region16
        $region15: #{tpu_custom_call.1} parent=11 // pred_region
          _
        $region16: #{tpu_custom_call.1} parent=11 // pred_fallthru
          _
      $region12: #{tpu_custom_call.1} parent=5 // pred_fallthru
        _
      %p129 = scmp.lt.s32.totalorder %s12, 2
      // Predicated region
      $region17: #{tpu_custom_call.1} parent=5 // pred_check
        %p130 = pneg %p129
      $region18: #{tpu_custom_call.1} parent=5 // pred_check_branch
        %132 = sbr.rel (%p130) target = $region20
      $region19: #{tpu_custom_call.1} parent=5 // pred_region
        // Predicated region
        $region21: #{tpu_custom_call.1} parent=19 // pred_check
          %p133 = pneg %p53
        $region22: #{tpu_custom_call.1} parent=19 // pred_check_branch
          %135 = sbr.rel (%p133) target = $region24
        $region23: #{tpu_custom_call.1} parent=19 // pred_region
          %p136 = scmp.lt.s32.totalorder %s12, 1
          %s137 = scalar_select %p136, %s12, 1
          %s138 = smul.addr %s137, 16
          %s139 = smul.addr %s138, 4
          %s140 = scalar_lea.vmem %s1, %s139
        $region24: #{tpu_custom_call.1} parent=19 // pred_fallthru
          _
        // Predicated region
        $region25: #{tpu_custom_call.1} parent=19 // pred_check
          %p141 = pneg %p79
        $region26: #{tpu_custom_call.1} parent=19 // pred_check_branch
          %143 = sbr.rel (%p141) target = $region28
        $region27: #{tpu_custom_call.1} parent=19 // pred_region
          %p144 = scmp.lt.s32.totalorder %s12, 1
          %s145 = scalar_select %p144, %s12, 1
          %s146 = smul.addr %s145, 16
          %s147 = scalar_lea.vmem %s2, %s146
        $region28: #{tpu_custom_call.1} parent=19 // pred_fallthru
          _
      $region20: #{tpu_custom_call.1} parent=5 // pred_fallthru
        _
      %p148 = scmp.le.s32.totalorder 1, %s12
      %p149 = scmp.lt.s32.totalorder %s12, 3
      %p150 = pnand %p148, %p149
      %p151 = pneg %p150
      // Predicated region
      $region29: #{tpu_custom_call.1} parent=5 // pred_check
        _
      $region30: #{tpu_custom_call.1} parent=5 // pred_check_branch
        %153 = sbr.rel (%p150) target = $region32
      $region31: #{tpu_custom_call.1} parent=5 // pred_region
        %s154 = ssub.s32 %s12, 1
        %p155 = pneg %p33
        %p156 = pneg %p30
        %p157 = scmp.lt.s32.totalorder %s17, 1
        %s158 = scalar_select %p157, %s17, 1
        %s159 = smul.addr %s158, 16
        %s160 = smul.addr %s159, 4
        %s161 = scalar_lea.vmem %s1, %s160
        %p162 = pneg %p59
        %p163 = pneg %p56
        %p164 = scmp.lt.s32.totalorder %s17, 1
        %s165 = scalar_select %p164, %s17, 1
        %s166 = smul.addr %s165, 16
        %s167 = scalar_lea.vmem %s2, %s166
        %p168 = pneg %p85
        %p169 = pneg %p82
        %p170 = pneg %p111
        %p171 = pneg %p108
        %s172 = sand.u32 %s98, 1
        %s173 = scalar_lea.sflag [#allocation3], %s172
        %s174 = sand.u32 %s98, 1
        %s175 = smul.addr %s174, 256
        %s176 = scalar_lea.vmem [#allocation2], %s175
        %p177 = scmp.lt.s32.totalorder %s17, 1
        %s178 = scalar_select %p177, %s17, 1
        %s179 = smul.addr %s178, 16
        %s180 = smul.addr %s179, 4
        %s181 = scalar_lea.vmem %s1, %s180
        %p182 = scmp.lt.s32.totalorder %s17, 1
        %s183 = scalar_select %p182, %s17, 1
        %s184 = smul.addr %s183, 16
        %s185 = scalar_lea.vmem %s2, %s184
        %v187 = vld [vmem:[%s0] sm:$0xff]
        %v188 = vld [vmem:[%s0 + $0x8] sm:$0xff]
        %v189 = vpack.c.bf16 %v188, %v187
        %v190 = vld [vmem:[%s181] sm:$0xff]
        %v191 = vld [vmem:[%s181 + $0x8] sm:$0xff]
        %v192 = vld [vmem:[%s181 + $0x10] sm:$0xff]
        %v193 = vld [vmem:[%s181 + $0x18] sm:$0xff]
        %v194 = vld [vmem:[%s181 + $0x20] sm:$0xff]
        %v195 = vld [vmem:[%s181 + $0x28] sm:$0xff]
        %v196 = vld [vmem:[%s181 + $0x30] sm:$0xff]
        %v197 = vld [vmem:[%s181 + $0x38] sm:$0xff]
        %v198 = vld [vmem:[%s185] sm:$0xff]
        %v199 = vld [vmem:[%s185 + $0x8] sm:$0xff]
        %v202 = vlaneseq
        %v203 = vshrl.u32 %v202, 7
        %v204 = vsub.s32 0, %v203
        %v205 = vrot.slane %v198, %v204
        %v206 = vlaneseq
        %v207 = vshrl.u32 %v206, 7
        %v208 = vsub.s32 1, %v207
        %v209 = vrot.slane %v198, %v208
        %v210 = vlaneseq
        %v211 = vshrl.u32 %v210, 7
        %v212 = vsub.s32 2, %v211
        %v213 = vrot.slane %v198, %v212
        %v214 = vlaneseq
        %v215 = vshrl.u32 %v214, 7
        %v216 = vsub.s32 3, %v215
        %v217 = vrot.slane %v198, %v216
        %v218 = vlaneseq
        %v219 = vshrl.u32 %v218, 7
        %v220 = vsub.s32 4, %v219
        %v221 = vrot.slane %v198, %v220
        %v222 = vlaneseq
        %v223 = vshrl.u32 %v222, 7
        %v224 = vsub.s32 5, %v223
        %v225 = vrot.slane %v198, %v224
        %v226 = vlaneseq
        %v227 = vshrl.u32 %v226, 7
        %v228 = vsub.s32 6, %v227
        %v229 = vrot.slane %v198, %v228
        %v230 = vlaneseq
        %v231 = vshrl.u32 %v230, 7
        %v232 = vsub.s32 7, %v231
        %v233 = vrot.slane %v198, %v232
        %v234 = vlaneseq
        %v235 = vshrl.u32 %v234, 7
        %v236 = vsub.s32 0, %v235
        %v237 = vrot.slane %v199, %v236
        %v238 = vlaneseq
        %v239 = vshrl.u32 %v238, 7
        %v240 = vsub.s32 1, %v239
        %v241 = vrot.slane %v199, %v240
        %v242 = vlaneseq
        %v243 = vshrl.u32 %v242, 7
        %v244 = vsub.s32 2, %v243
        %v245 = vrot.slane %v199, %v244
        %v246 = vlaneseq
        %v247 = vshrl.u32 %v246, 7
        %v248 = vsub.s32 3, %v247
        %v249 = vrot.slane %v199, %v248
        %v250 = vlaneseq
        %v251 = vshrl.u32 %v250, 7
        %v252 = vsub.s32 4, %v251
        %v253 = vrot.slane %v199, %v252
        %v254 = vlaneseq
        %v255 = vshrl.u32 %v254, 7
        %v256 = vsub.s32 5, %v255
        %v257 = vrot.slane %v199, %v256
        %v258 = vlaneseq
        %v259 = vshrl.u32 %v258, 7
        %v260 = vsub.s32 6, %v259
        %v261 = vrot.slane %v199, %v260
        %v262 = vlaneseq
        %v263 = vshrl.u32 %v262, 7
        %v264 = vsub.s32 7, %v263
        %v265 = vrot.slane %v199, %v264
        %v290 = vunpack.c.l.b16 %v190
        %v291 = vunpack.c.h.b16 %v190
        %v292 = vunpack.c.l.b16 %v191
        %v293 = vunpack.c.h.b16 %v191
        %v294 = vunpack.c.l.b16 %v192
        %v295 = vunpack.c.h.b16 %v192
        %v296 = vunpack.c.l.b16 %v193
        %v297 = vunpack.c.h.b16 %v193
        %v298 = vunpack.c.l.b16 %v194
        %v299 = vunpack.c.h.b16 %v194
        %v300 = vunpack.c.l.b16 %v195
        %v301 = vunpack.c.h.b16 %v195
        %v302 = vunpack.c.l.b16 %v196
        %v303 = vunpack.c.h.b16 %v196
        %v304 = vunpack.c.l.b16 %v197
        %v305 = vunpack.c.h.b16 %v197
        %v306 = vpack.c.b16 %v290, %v290
        %v307 = vpack.c.b16 %v291, %v291
        %v308 = vpack.c.b16 %v292, %v292
        %v309 = vpack.c.b16 %v293, %v293
        %v310 = vpack.c.b16 %v294, %v294
        %v311 = vpack.c.b16 %v295, %v295
        %v312 = vpack.c.b16 %v296, %v296
        %v313 = vpack.c.b16 %v297, %v297
        %v314 = vpack.c.b16 %v298, %v298
        %v315 = vpack.c.b16 %v299, %v299
        %v316 = vpack.c.b16 %v300, %v300
        %v317 = vpack.c.b16 %v301, %v301
        %v318 = vpack.c.b16 %v302, %v302
        %v319 = vpack.c.b16 %v303, %v303
        %v320 = vpack.c.b16 %v304, %v304
        %v321 = vpack.c.b16 %v305, %v305
        %vm322 = vcmask 56320
        %v324 = vsel %vm322, %v189, 0
        %vm326 = vcmask 1042432
        %vm327 = vcmask 1043456
        %v328 = vsel %vm326, 4294967295, 65535
        %v329 = vsel %vm327, %v328, 0
        %v331 = vand.u32 %v306, %v329
        %v334 = vand.u32 %v307, %v329
        %v337 = vand.u32 %v308, %v329
        %v340 = vand.u32 %v309, %v329
        %v343 = vand.u32 %v310, %v329
        %v346 = vand.u32 %v311, %v329
        %v349 = vand.u32 %v312, %v329
        %v352 = vand.u32 %v313, %v329
        %v355 = vand.u32 %v314, %v329
        %v358 = vand.u32 %v315, %v329
        %v361 = vand.u32 %v316, %v329
        %v364 = vand.u32 %v317, %v329
        %v367 = vand.u32 %v318, %v329
        %v370 = vand.u32 %v319, %v329
        %v373 = vand.u32 %v320, %v329
        %v376 = vand.u32 %v321, %v329
        %378 = vmatprep.subr.bf16.mxu0 %v334
        %379 = vmatpush1.bf16.msra.mxu0 %v331
        %380 = vmatprep.subr.bf16.mxu0 0
        %381 = vmatpush1.bf16.msra.mxu0 0
        %382 = vmatprep.subr.bf16.mxu0 0
        %383 = vmatpush1.bf16.msra.mxu0 0
        %384 = vmatprep.subr.bf16.mxu0 0
        %385 = vmatpush1.bf16.msra.mxu0 0
        %386 = vmatprep.subr.bf16.mxu0 0
        %387 = vmatpush1.bf16.msra.mxu0 0
        %388 = vmatprep.subr.bf16.mxu0 0
        %389 = vmatpush1.bf16.msra.mxu0 0
        %390 = vmatprep.subr.bf16.mxu0 0
        %391 = vmatpush1.bf16.msra.mxu0 0
        %392 = vmatprep.subr.bf16.mxu0 0
        %393 = vmatpush1.bf16.msra.mxu0 0
        %394 = vmatprep.subr.bf16.mxu0 0
        %395 = vmatpush1.bf16.msra.mxu0 0
        %396 = vmatprep.subr.bf16.mxu0 0
        %397 = vmatpush1.bf16.msra.mxu0 0
        %398 = vmatprep.subr.bf16.mxu0 0
        %399 = vmatpush1.bf16.msra.mxu0 0
        %400 = vmatprep.subr.bf16.mxu0 0
        %401 = vmatpush1.bf16.msra.mxu0 0
        %402 = vmatprep.subr.bf16.mxu0 0
        %403 = vmatpush1.bf16.msra.mxu0 0
        %404 = vmatprep.subr.bf16.mxu0 0
        %405 = vmatpush1.bf16.msra.mxu0 0
        %406 = vmatprep.subr.bf16.mxu0 0
        %407 = vmatpush1.bf16.msra.mxu0 0
        %408 = vmatprep.subr.bf16.mxu0 0
        %409 = vmatpush1.bf16.msra.mxu0 0
        %410 = vmatprep.mubr.bf16.mxu0 0
        %411 = vmatmul.mubr.bf16.gmra.mrb[0].mxu0 %v324
        %v412 = vpop.f32.mrb[0].mxu0
        %v413 = vadd.f32 %v205, %v412
        %v414 = vpop.f32.mrb[0].mxu0
        %v415 = vadd.f32 %v209, %v414
        %v416 = vpop.f32.mrb[0].mxu0
        %v417 = vadd.f32 %v205, %v416
        %v418 = vpop.f32.mrb[0].mxu0
        %v419 = vadd.f32 %v209, %v418
        %420 = vdwg.mxu0
        %421 = vmatprep.subr.bf16.mxu0 %v340
        %422 = vmatpush1.bf16.msra.mxu0 %v337
        %423 = vmatprep.subr.bf16.mxu0 0
        %424 = vmatpush1.bf16.msra.mxu0 0
        %425 = vmatprep.subr.bf16.mxu0 0
        %426 = vmatpush1.bf16.msra.mxu0 0
        %427 = vmatprep.subr.bf16.mxu0 0
        %428 = vmatpush1.bf16.msra.mxu0 0
        %429 = vmatprep.subr.bf16.mxu0 0
        %430 = vmatpush1.bf16.msra.mxu0 0
        %431 = vmatprep.subr.bf16.mxu0 0
        %432 = vmatpush1.bf16.msra.mxu0 0
        %433 = vmatprep.subr.bf16.mxu0 0
        %434 = vmatpush1.bf16.msra.mxu0 0
        %435 = vmatprep.subr.bf16.mxu0 0
        %436 = vmatpush1.bf16.msra.mxu0 0
        %437 = vmatprep.subr.bf16.mxu0 0
        %438 = vmatpush1.bf16.msra.mxu0 0
        %439 = vmatprep.subr.bf16.mxu0 0
        %440 = vmatpush1.bf16.msra.mxu0 0
        %441 = vmatprep.subr.bf16.mxu0 0
        %442 = vmatpush1.bf16.msra.mxu0 0
        %443 = vmatprep.subr.bf16.mxu0 0
        %444 = vmatpush1.bf16.msra.mxu0 0
        %445 = vmatprep.subr.bf16.mxu0 0
        %446 = vmatpush1.bf16.msra.mxu0 0
        %447 = vmatprep.subr.bf16.mxu0 0
        %448 = vmatpush1.bf16.msra.mxu0 0
        %449 = vmatprep.subr.bf16.mxu0 0
        %450 = vmatpush1.bf16.msra.mxu0 0
        %451 = vmatprep.subr.bf16.mxu0 0
        %452 = vmatpush1.bf16.msra.mxu0 0
        %453 = vmatprep.mubr.bf16.mxu0 0
        %454 = vmatmul.mubr.bf16.gmra.mrb[0].mxu0 %v324
        %v455 = vpop.f32.mrb[0].mxu0
        %v456 = vadd.f32 %v213, %v455
        %v457 = vpop.f32.mrb[0].mxu0
        %v458 = vadd.f32 %v217, %v457
        %v459 = vpop.f32.mrb[0].mxu0
        %v460 = vadd.f32 %v213, %v459
        %v461 = vpop.f32.mrb[0].mxu0
        %v462 = vadd.f32 %v217, %v461
        %463 = vdwg.mxu0
        %464 = vmatprep.subr.bf16.mxu0 %v346
        %465 = vmatpush1.bf16.msra.mxu0 %v343
        %466 = vmatprep.subr.bf16.mxu0 0
        %467 = vmatpush1.bf16.msra.mxu0 0
        %468 = vmatprep.subr.bf16.mxu0 0
        %469 = vmatpush1.bf16.msra.mxu0 0
        %470 = vmatprep.subr.bf16.mxu0 0
        %471 = vmatpush1.bf16.msra.mxu0 0
        %472 = vmatprep.subr.bf16.mxu0 0
        %473 = vmatpush1.bf16.msra.mxu0 0
        %474 = vmatprep.subr.bf16.mxu0 0
        %475 = vmatpush1.bf16.msra.mxu0 0
        %476 = vmatprep.subr.bf16.mxu0 0
        %477 = vmatpush1.bf16.msra.mxu0 0
        %478 = vmatprep.subr.bf16.mxu0 0
        %479 = vmatpush1.bf16.msra.mxu0 0
        %480 = vmatprep.subr.bf16.mxu0 0
        %481 = vmatpush1.bf16.msra.mxu0 0
        %482 = vmatprep.subr.bf16.mxu0 0
        %483 = vmatpush1.bf16.msra.mxu0 0
        %484 = vmatprep.subr.bf16.mxu0 0
        %485 = vmatpush1.bf16.msra.mxu0 0
        %486 = vmatprep.subr.bf16.mxu0 0
        %487 = vmatpush1.bf16.msra.mxu0 0
        %488 = vmatprep.subr.bf16.mxu0 0
        %489 = vmatpush1.bf16.msra.mxu0 0
        %490 = vmatprep.subr.bf16.mxu0 0
        %491 = vmatpush1.bf16.msra.mxu0 0
        %492 = vmatprep.subr.bf16.mxu0 0
        %493 = vmatpush1.bf16.msra.mxu0 0
        %494 = vmatprep.subr.bf16.mxu0 0
        %495 = vmatpush1.bf16.msra.mxu0 0
        %496 = vmatprep.mubr.bf16.mxu0 0
        %497 = vmatmul.mubr.bf16.gmra.mrb[0].mxu0 %v324
        %v498 = vpop.f32.mrb[0].mxu0
        %v499 = vadd.f32 %v221, %v498
        %v500 = vpop.f32.mrb[0].mxu0
        %v501 = vadd.f32 %v225, %v500
        %v502 = vpop.f32.mrb[0].mxu0
        %v503 = vadd.f32 %v221, %v502
        %v504 = vpop.f32.mrb[0].mxu0
        %v505 = vadd.f32 %v225, %v504
        %506 = vdwg.mxu0
        %507 = vmatprep.subr.bf16.mxu0 %v352
        %508 = vmatpush1.bf16.msra.mxu0 %v349
        %509 = vmatprep.subr.bf16.mxu0 0
        %510 = vmatpush1.bf16.msra.mxu0 0
        %511 = vmatprep.subr.bf16.mxu0 0
        %512 = vmatpush1.bf16.msra.mxu0 0
        %513 = vmatprep.subr.bf16.mxu0 0
        %514 = vmatpush1.bf16.msra.mxu0 0
        %515 = vmatprep.subr.bf16.mxu0 0
        %516 = vmatpush1.bf16.msra.mxu0 0
        %517 = vmatprep.subr.bf16.mxu0 0
        %518 = vmatpush1.bf16.msra.mxu0 0
        %519 = vmatprep.subr.bf16.mxu0 0
        %520 = vmatpush1.bf16.msra.mxu0 0
        %521 = vmatprep.subr.bf16.mxu0 0
        %522 = vmatpush1.bf16.msra.mxu0 0
        %523 = vmatprep.subr.bf16.mxu0 0
        %524 = vmatpush1.bf16.msra.mxu0 0
        %525 = vmatprep.subr.bf16.mxu0 0
        %526 = vmatpush1.bf16.msra.mxu0 0
        %527 = vmatprep.subr.bf16.mxu0 0
        %528 = vmatpush1.bf16.msra.mxu0 0
        %529 = vmatprep.subr.bf16.mxu0 0
        %530 = vmatpush1.bf16.msra.mxu0 0
        %531 = vmatprep.subr.bf16.mxu0 0
        %532 = vmatpush1.bf16.msra.mxu0 0
        %533 = vmatprep.subr.bf16.mxu0 0
        %534 = vmatpush1.bf16.msra.mxu0 0
        %535 = vmatprep.subr.bf16.mxu0 0
        %536 = vmatpush1.bf16.msra.mxu0 0
        %537 = vmatprep.subr.bf16.mxu0 0
        %538 = vmatpush1.bf16.msra.mxu0 0
        %539 = vmatprep.mubr.bf16.mxu0 0
        %540 = vmatmul.mubr.bf16.gmra.mrb[0].mxu0 %v324
        %v541 = vpop.f32.mrb[0].mxu0
        %v542 = vadd.f32 %v229, %v541
        %v543 = vpop.f32.mrb[0].mxu0
        %v544 = vadd.f32 %v233, %v543
        %v545 = vpop.f32.mrb[0].mxu0
        %v546 = vadd.f32 %v229, %v545
        %v547 = vpop.f32.mrb[0].mxu0
        %v548 = vadd.f32 %v233, %v547
        %549 = vdwg.mxu0
        %550 = vmatprep.subr.bf16.mxu0 %v358
        %551 = vmatpush1.bf16.msra.mxu0 %v355
        %552 = vmatprep.subr.bf16.mxu0 0
        %553 = vmatpush1.bf16.msra.mxu0 0
        %554 = vmatprep.subr.bf16.mxu0 0
        %555 = vmatpush1.bf16.msra.mxu0 0
        %556 = vmatprep.subr.bf16.mxu0 0
        %557 = vmatpush1.bf16.msra.mxu0 0
        %558 = vmatprep.subr.bf16.mxu0 0
        %559 = vmatpush1.bf16.msra.mxu0 0
        %560 = vmatprep.subr.bf16.mxu0 0
        %561 = vmatpush1.bf16.msra.mxu0 0
        %562 = vmatprep.subr.bf16.mxu0 0
        %563 = vmatpush1.bf16.msra.mxu0 0
        %564 = vmatprep.subr.bf16.mxu0 0
        %565 = vmatpush1.bf16.msra.mxu0 0
        %566 = vmatprep.subr.bf16.mxu0 0
        %567 = vmatpush1.bf16.msra.mxu0 0
        %568 = vmatprep.subr.bf16.mxu0 0
        %569 = vmatpush1.bf16.msra.mxu0 0
        %570 = vmatprep.subr.bf16.mxu0 0
        %571 = vmatpush1.bf16.msra.mxu0 0
        %572 = vmatprep.subr.bf16.mxu0 0
        %573 = vmatpush1.bf16.msra.mxu0 0
        %574 = vmatprep.subr.bf16.mxu0 0
        %575 = vmatpush1.bf16.msra.mxu0 0
        %576 = vmatprep.subr.bf16.mxu0 0
        %577 = vmatpush1.bf16.msra.mxu0 0
        %578 = vmatprep.subr.bf16.mxu0 0
        %579 = vmatpush1.bf16.msra.mxu0 0
        %580 = vmatprep.subr.bf16.mxu0 0
        %581 = vmatpush1.bf16.msra.mxu0 0
        %582 = vmatprep.mubr.bf16.mxu0 0
        %583 = vmatmul.mubr.bf16.gmra.mrb[0].mxu0 %v324
        %v584 = vpop.f32.mrb[0].mxu0
        %v585 = vadd.f32 %v237, %v584
        %v586 = vpop.f32.mrb[0].mxu0
        %v587 = vadd.f32 %v241, %v586
        %v588 = vpop.f32.mrb[0].mxu0
        %v589 = vadd.f32 %v237, %v588
        %v590 = vpop.f32.mrb[0].mxu0
        %v591 = vadd.f32 %v241, %v590
        %592 = vdwg.mxu0
        %593 = vmatprep.subr.bf16.mxu0 %v364
        %594 = vmatpush1.bf16.msra.mxu0 %v361
        %595 = vmatprep.subr.bf16.mxu0 0
        %596 = vmatpush1.bf16.msra.mxu0 0
        %597 = vmatprep.subr.bf16.mxu0 0
        %598 = vmatpush1.bf16.msra.mxu0 0
        %599 = vmatprep.subr.bf16.mxu0 0
        %600 = vmatpush1.bf16.msra.mxu0 0
        %601 = vmatprep.subr.bf16.mxu0 0
        %602 = vmatpush1.bf16.msra.mxu0 0
        %603 = vmatprep.subr.bf16.mxu0 0
        %604 = vmatpush1.bf16.msra.mxu0 0
        %605 = vmatprep.subr.bf16.mxu0 0
        %606 = vmatpush1.bf16.msra.mxu0 0
        %607 = vmatprep.subr.bf16.mxu0 0
        %608 = vmatpush1.bf16.msra.mxu0 0
        %609 = vmatprep.subr.bf16.mxu0 0
        %610 = vmatpush1.bf16.msra.mxu0 0
        %611 = vmatprep.subr.bf16.mxu0 0
        %612 = vmatpush1.bf16.msra.mxu0 0
        %613 = vmatprep.subr.bf16.mxu0 0
        %614 = vmatpush1.bf16.msra.mxu0 0
        %615 = vmatprep.subr.bf16.mxu0 0
        %616 = vmatpush1.bf16.msra.mxu0 0
        %617 = vmatprep.subr.bf16.mxu0 0
        %618 = vmatpush1.bf16.msra.mxu0 0
        %619 = vmatprep.subr.bf16.mxu0 0
        %620 = vmatpush1.bf16.msra.mxu0 0
        %621 = vmatprep.subr.bf16.mxu0 0
        %622 = vmatpush1.bf16.msra.mxu0 0
        %623 = vmatprep.subr.bf16.mxu0 0
        %624 = vmatpush1.bf16.msra.mxu0 0
        %625 = vmatprep.mubr.bf16.mxu0 0
        %626 = vmatmul.mubr.bf16.gmra.mrb[0].mxu0 %v324
        %v627 = vpop.f32.mrb[0].mxu0
        %v628 = vadd.f32 %v245, %v627
        %v629 = vpop.f32.mrb[0].mxu0
        %v630 = vadd.f32 %v249, %v629
        %v631 = vpop.f32.mrb[0].mxu0
        %v632 = vadd.f32 %v245, %v631
        %v633 = vpop.f32.mrb[0].mxu0
        %v634 = vadd.f32 %v249, %v633
        %635 = vdwg.mxu0
        %636 = vmatprep.subr.bf16.mxu0 %v370
        %637 = vmatpush1.bf16.msra.mxu0 %v367
        %638 = vmatprep.subr.bf16.mxu0 0
        %639 = vmatpush1.bf16.msra.mxu0 0
        %640 = vmatprep.subr.bf16.mxu0 0
        %641 = vmatpush1.bf16.msra.mxu0 0
        %642 = vmatprep.subr.bf16.mxu0 0
        %643 = vmatpush1.bf16.msra.mxu0 0
        %644 = vmatprep.subr.bf16.mxu0 0
        %645 = vmatpush1.bf16.msra.mxu0 0
        %646 = vmatprep.subr.bf16.mxu0 0
        %647 = vmatpush1.bf16.msra.mxu0 0
        %648 = vmatprep.subr.bf16.mxu0 0
        %649 = vmatpush1.bf16.msra.mxu0 0
        %650 = vmatprep.subr.bf16.mxu0 0
        %651 = vmatpush1.bf16.msra.mxu0 0
        %652 = vmatprep.subr.bf16.mxu0 0
        %653 = vmatpush1.bf16.msra.mxu0 0
        %654 = vmatprep.subr.bf16.mxu0 0
        %655 = vmatpush1.bf16.msra.mxu0 0
        %656 = vmatprep.subr.bf16.mxu0 0
        %657 = vmatpush1.bf16.msra.mxu0 0
        %658 = vmatprep.subr.bf16.mxu0 0
        %659 = vmatpush1.bf16.msra.mxu0 0
        %660 = vmatprep.subr.bf16.mxu0 0
        %661 = vmatpush1.bf16.msra.mxu0 0
        %662 = vmatprep.subr.bf16.mxu0 0
        %663 = vmatpush1.bf16.msra.mxu0 0
        %664 = vmatprep.subr.bf16.mxu0 0
        %665 = vmatpush1.bf16.msra.mxu0 0
        %666 = vmatprep.subr.bf16.mxu0 0
        %667 = vmatpush1.bf16.msra.mxu0 0
        %668 = vmatprep.mubr.bf16.mxu0 0
        %669 = vmatmul.mubr.bf16.gmra.mrb[0].mxu0 %v324
        %v670 = vpop.f32.mrb[0].mxu0
        %v671 = vadd.f32 %v253, %v670
        %v672 = vpop.f32.mrb[0].mxu0
        %v673 = vadd.f32 %v257, %v672
        %v674 = vpop.f32.mrb[0].mxu0
        %v675 = vadd.f32 %v253, %v674
        %v676 = vpop.f32.mrb[0].mxu0
        %v677 = vadd.f32 %v257, %v676
        %678 = vdwg.mxu0
        %679 = vmatprep.subr.bf16.mxu0 %v376
        %680 = vmatpush1.bf16.msra.mxu0 %v373
        %681 = vmatprep.subr.bf16.mxu0 0
        %682 = vmatpush1.bf16.msra.mxu0 0
        %683 = vmatprep.subr.bf16.mxu0 0
        %684 = vmatpush1.bf16.msra.mxu0 0
        %685 = vmatprep.subr.bf16.mxu0 0
        %686 = vmatpush1.bf16.msra.mxu0 0
        %687 = vmatprep.subr.bf16.mxu0 0
        %688 = vmatpush1.bf16.msra.mxu0 0
        %689 = vmatprep.subr.bf16.mxu0 0
        %690 = vmatpush1.bf16.msra.mxu0 0
        %691 = vmatprep.subr.bf16.mxu0 0
        %692 = vmatpush1.bf16.msra.mxu0 0
        %693 = vmatprep.subr.bf16.mxu0 0
        %694 = vmatpush1.bf16.msra.mxu0 0
        %695 = vmatprep.subr.bf16.mxu0 0
        %696 = vmatpush1.bf16.msra.mxu0 0
        %697 = vmatprep.subr.bf16.mxu0 0
        %698 = vmatpush1.bf16.msra.mxu0 0
        %699 = vmatprep.subr.bf16.mxu0 0
        %700 = vmatpush1.bf16.msra.mxu0 0
        %701 = vmatprep.subr.bf16.mxu0 0
        %702 = vmatpush1.bf16.msra.mxu0 0
        %703 = vmatprep.subr.bf16.mxu0 0
        %704 = vmatpush1.bf16.msra.mxu0 0
        %705 = vmatprep.subr.bf16.mxu0 0
        %706 = vmatpush1.bf16.msra.mxu0 0
        %707 = vmatprep.subr.bf16.mxu0 0
        %708 = vmatpush1.bf16.msra.mxu0 0
        %709 = vmatprep.subr.bf16.mxu0 0
        %710 = vmatpush1.bf16.msra.mxu0 0
        %711 = vmatprep.mubr.bf16.mxu0 0
        %712 = vmatmul.mubr.bf16.gmra.mrb[0].mxu0 %v324
        %v713 = vpop.f32.mrb[0].mxu0
        %v714 = vadd.f32 %v261, %v713
        %v715 = vpop.f32.mrb[0].mxu0
        %v716 = vadd.f32 %v265, %v715
        %v717 = vpop.f32.mrb[0].mxu0
        %v718 = vadd.f32 %v261, %v717
        %v719 = vpop.f32.mrb[0].mxu0
        %v720 = vadd.f32 %v265, %v719
        %721 = vdwg.mxu0
        %722 = vst [vmem:[%s176] sm:$0xff] %v413
        %723 = vst [vmem:[%s176 + $0x8] sm:$0xff] %v415
        %724 = vst [vmem:[%s176 + $0x10] sm:$0xff] %v456
        %725 = vst [vmem:[%s176 + $0x18] sm:$0xff] %v458
        %726 = vst [vmem:[%s176 + $0x20] sm:$0xff] %v499
        %727 = vst [vmem:[%s176 + $0x28] sm:$0xff] %v501
        %728 = vst [vmem:[%s176 + $0x30] sm:$0xff] %v542
        %729 = vst [vmem:[%s176 + $0x38] sm:$0xff] %v544
        %730 = vst [vmem:[%s176 + $0x40] sm:$0xff] %v585
        %731 = vst [vmem:[%s176 + $0x48] sm:$0xff] %v587
        %732 = vst [vmem:[%s176 + $0x50] sm:$0xff] %v628
        %733 = vst [vmem:[%s176 + $0x58] sm:$0xff] %v630
        %734 = vst [vmem:[%s176 + $0x60] sm:$0xff] %v671
        %735 = vst [vmem:[%s176 + $0x68] sm:$0xff] %v673
        %736 = vst [vmem:[%s176 + $0x70] sm:$0xff] %v714
        %737 = vst [vmem:[%s176 + $0x78] sm:$0xff] %v716
        %738 = vst [vmem:[%s176 + $0x80] sm:$0xff] %v417
        %739 = vst [vmem:[%s176 + $0x88] sm:$0xff] %v419
        %740 = vst [vmem:[%s176 + $0x90] sm:$0xff] %v460
        %741 = vst [vmem:[%s176 + $0x98] sm:$0xff] %v462
        %742 = vst [vmem:[%s176 + $0xa0] sm:$0xff] %v503
        %743 = vst [vmem:[%s176 + $0xa8] sm:$0xff] %v505
        %744 = vst [vmem:[%s176 + $0xb0] sm:$0xff] %v546
        %745 = vst [vmem:[%s176 + $0xb8] sm:$0xff] %v548
        %746 = vst [vmem:[%s176 + $0xc0] sm:$0xff] %v589
        %747 = vst [vmem:[%s176 + $0xc8] sm:$0xff] %v591
        %748 = vst [vmem:[%s176 + $0xd0] sm:$0xff] %v632
        %749 = vst [vmem:[%s176 + $0xd8] sm:$0xff] %v634
        %750 = vst [vmem:[%s176 + $0xe0] sm:$0xff] %v675
        %751 = vst [vmem:[%s176 + $0xe8] sm:$0xff] %v677
        %752 = vst [vmem:[%s176 + $0xf0] sm:$0xff] %v718
        %753 = vst [vmem:[%s176 + $0xf8] sm:$0xff] %v720
        %s754 = sand.u32 %s98, 1
        %s755 = scalar_lea.sflag [#allocation3], %s754
        %s756 = sand.u32 %s98, 1
        %s757 = smul.addr %s756, 256
        %s758 = scalar_lea.vmem [#allocation2], %s757
        // Predicated region
        $region33: #{tpu_custom_call.1} parent=31 // pred_check
          %p759 = pneg %p108
        $region34: #{tpu_custom_call.1} parent=31 // pred_check_branch
          %761 = sbr.rel (%p759) target = $region36
        $region35: #{tpu_custom_call.1} parent=31 // pred_region
          %s763 = ssub.s32 4096, 4096
          %764 = vsyncadd %s755, %s763
          %s765 = smul.addr %s17, 32
          %s766 = smul.addr %s765, 128
          %s767 = scalar_lea.hbm %s3, %s766
          %s768 = sshll.u32 %s758, 4
          %s769 = int_to_ptr.vmem [resolvable:$true] %s768
          %774 = dma.vmem_to_hbm [thread:$0]  %s769, 4096, %s767, %s755, 2048, 2048, 128
        $region36: #{tpu_custom_call.1} parent=31 // pred_fallthru
          _
      $region32: #{tpu_custom_call.1} parent=5 // pred_fallthru
        _
      %p775 = scmp.le.s32.totalorder 2, %s12
      // Predicated region
      $region37: #{tpu_custom_call.1} parent=5 // pred_check
        %p776 = pneg %p775
      $region38: #{tpu_custom_call.1} parent=5 // pred_check_branch
        %778 = sbr.rel (%p776) target = $region40
      $region39: #{tpu_custom_call.1} parent=5 // pred_region
        %s779 = ssub.s32 %s12, 2
        // Predicated region
        $region41: #{tpu_custom_call.1} parent=39 // pred_check
          %p780 = pneg %p114
        $region42: #{tpu_custom_call.1} parent=39 // pred_check_branch
          %782 = sbr.rel (%p780) target = $region44
        $region43: #{tpu_custom_call.1} parent=39 // pred_region
          %s783 = sand.u32 %s99, 1
          %s784 = scalar_lea.sflag [#allocation3], %s783
          %s785 = sand.u32 %s99, 1
          %s786 = smul.addr %s785, 256
          %s787 = scalar_lea.vmem [#allocation2], %s786
          %788 = dma.done %s784, 4096
        $region44: #{tpu_custom_call.1} parent=39 // pred_fallthru
          _
      $region40: #{tpu_custom_call.1} parent=5 // pred_fallthru
        _
    $region6: #{tpu_custom_call.1} parent=1 // loop_footer
      %s16 = sadd.s32 1, %s12
    $region7: #{tpu_custom_call.1} parent=1 // loop_footer_branch
      %11 = sbr.rel target = $region3
    $region8: #{tpu_custom_call.1} parent=1 // loop_exit
      _
    %789 = vsyncpa [#allocation3], 1
    %s790 = scalar_lea.sflag [#allocation3], 1
    %791 = vsyncpa %s790, 1

</llo_original>
